<compile_context>
chip_gen: v5e
topology: v5e:2x2
jax: 0.10.0
libtpu: 0.0.40
codegen_flags: <defaults>
</compile_context>

<pallas_src>
import functools
import math

import jax
import jax.numpy as jnp
from jax.experimental import pallas as pl
from jax.experimental.pallas import tpu as pltpu


def _round_up(x, m):
    return ((x + m - 1) // m) * m


# ----------------------------------------------------------------------------
# Kernel
# ----------------------------------------------------------------------------
def actor_kernel(
    state_ref,
    w1_ref, b1_ref,
    w2_ref, b2_ref,
    w3_ref, b3_ref,
    ws_ref, bs_ref,
    wh_ref, bh_ref,          # fused heads: [mean | log_std]
    out_ref,
    *, action_dim,
):
    def linear(x, w_ref, b_ref):
        # bf16 x bf16 MXU matmul, f32 accumulation, f32 bias add.
        return jnp.dot(x.astype(jnp.bfloat16), w_ref[...],
                       preferred_element_type=jnp.float32) + b_ref[...]

    x = state_ref[...]                                   # f32 (tb, state_dim)

    h = jnp.maximum(linear(x, w1_ref, b1_ref), 0.0)      # fc1 + ReLU
    # dropout(p=0.1) is identity at inference (eval mode)
    # TODO(synk): training-mode dropout (pltpu.prng_seed / prng_random_bits) not implemented.
    h = jnp.maximum(linear(h, w2_ref, b2_ref), 0.0)      # fc2 + ReLU
    h = jnp.maximum(linear(h, w3_ref, b3_ref), 0.0)      # fc3 + ReLU
    h = jnp.maximum(linear(h, ws_ref, bs_ref), 0.0)      # smoothing_layer + ReLU

    # Fused heads: single matmul + single lane-denser store.
    head = linear(h, wh_ref, bh_ref)                     # (tb, 2*action_dim)
    lane = jax.lax.broadcasted_iota(jnp.int32, head.shape, 1)
    out_ref[...] = jnp.where(lane >= action_dim,
                             jnp.clip(head, -10.0, 2.0),  # log_std half
                             head)                        # mean half


# ----------------------------------------------------------------------------
# Wrapper
# ----------------------------------------------------------------------------
def actor_forward(state, params, *, batch_tile=256):
    """Returns (mean, log_std) exactly like Actor.forward (eval mode)."""
    batch, state_dim = state.shape
    hidden_dim = params["w1"].shape[1]
    action_dim = params["wm"].shape[1]
    head_dim = 2 * action_dim

    # bf16 weights (halved HBM traffic, native MXU dtype); biases stay f32.
    w1 = params["w1"].astype(jnp.bfloat16)
    w2 = params["w2"].astype(jnp.bfloat16)
    w3 = params["w3"].astype(jnp.bfloat16)
    ws = params["ws"].astype(jnp.bfloat16)
    wh = jnp.concatenate([params["wm"], params["wsd"]], axis=1).astype(jnp.bfloat16)
    bh = jnp.concatenate([params["bm"], params["bsd"]], axis=1)

    # Batch tiling: pad batch up to a multiple of the tile (>= one sublane tile).
    tb = min(batch_tile, _round_up(batch, 8))
    b_pad = _round_up(batch, tb)
    if b_pad != batch:
        state = jnp.pad(state, ((0, b_pad - batch), (0, 0)))
    grid = (b_pad // tb,)

    def full(arr):  # whole-array block, resident across grid steps
        return pl.BlockSpec(arr.shape, lambda i: (0, 0))

    in_specs = [
        pl.BlockSpec((tb, state_dim), lambda i: (i, 0)),
        full(w1), full(params["b1"]),
        full(w2), full(params["b2"]),
        full(w3), full(params["b3"]),
        full(ws), full(params["bs"]),
        full(wh), full(bh),
    ]
    out_spec = pl.BlockSpec((tb, head_dim), lambda i: (i, 0))

    # Advisory cost hint for XLA's scheduler.
    flops = 2 * b_pad * (state_dim * hidden_dim
                         + 3 * hidden_dim * hidden_dim
                         + hidden_dim * head_dim)
    weight_bytes = 2 * (state_dim * hidden_dim
                        + 3 * hidden_dim * hidden_dim
                        + hidden_dim * head_dim)
    bias_bytes = 4 * (4 * hidden_dim + head_dim)
    io_bytes = 4 * b_pad * (state_dim + head_dim)
    cost = pl.CostEstimate(flops=flops, transcendentals=0,
                           bytes_accessed=weight_bytes + bias_bytes + io_bytes)

    out = pl.pallas_call(
        functools.partial(actor_kernel, action_dim=action_dim),
        out_shape=jax.ShapeDtypeStruct((b_pad, head_dim), jnp.float32),
        grid=grid,
        in_specs=in_specs,
        out_specs=out_spec,
        compiler_params=pltpu.CompilerParams(
            dimension_semantics=("parallel",)),
        cost_estimate=cost,
    )(state, w1, params["b1"], w2, params["b2"], w3, params["b3"],
      ws, params["bs"], wh, bh)

    out = out[:batch]
    return out[:, :action_dim], out[:, action_dim:]


# ----------------------------------------------------------------------------
# Deterministic parameter init (xavier_uniform weights, zero biases)
# ----------------------------------------------------------------------------
def xavier_uniform(key, fan_in, fan_out):
    bound = math.sqrt(6.0 / (fan_in + fan_out))
    # stored as [in, out] so the kernel does x @ W
    return jax.random.uniform(
        key, (fan_in, fan_out), minval=-bound, maxval=bound, dtype=jnp.float32
    )


def init_actor_params(key, state_dim, action_dim, hidden_dim):
    keys = jax.random.split(key, 6)
    return {
        "w1": xavier_uniform(keys[0], state_dim, hidden_dim),
        "b1": jnp.zeros((1, hidden_dim), jnp.float32),
        "w2": xavier_uniform(keys[1], hidden_dim, hidden_dim),
        "b2": jnp.zeros((1, hidden_dim), jnp.float32),
        "w3": xavier_uniform(keys[2], hidden_dim, hidden_dim),
        "b3": jnp.zeros((1, hidden_dim), jnp.float32),
        "ws": xavier_uniform(keys[3], hidden_dim, hidden_dim),
        "bs": jnp.zeros((1, hidden_dim), jnp.float32),
        "wm": xavier_uniform(keys[4], hidden_dim, action_dim),
        "bm": jnp.zeros((1, action_dim), jnp.float32),
        "wsd": xavier_uniform(keys[5], hidden_dim, action_dim),
        "bsd": jnp.zeros((1, action_dim), jnp.float32),
    }


# ----------------------------------------------------------------------------
# Pure-JAX reference (same bf16-weight numerics, for a sanity check)
# ----------------------------------------------------------------------------
def actor_forward_ref(state, p):
    def lin(x, w, b):
        return jnp.dot(x.astype(jnp.bfloat16), w.astype(jnp.bfloat16),
                       preferred_element_type=jnp.float32) + b

    h = jax.nn.relu(lin(state, p["w1"], p["b1"]))
    h = jax.nn.relu(lin(h, p["w2"], p["b2"]))
    h = jax.nn.relu(lin(h, p["w3"], p["b3"]))
    h = jax.nn.relu(lin(h, p["ws"], p["bs"]))
    mean = lin(h, p["wm"], p["bm"])
    log_std = jnp.clip(lin(h, p["wsd"], p["bsd"]), -10.0, 2.0)
    return mean, log_std


if __name__ == "__main__":
    state_dim, action_dim, hidden_dim = 16, 8, 256
    batch = 4

    key = jax.random.PRNGKey(0)
    k_params, k_state = jax.random.split(key)

    params = init_actor_params(k_params, state_dim, action_dim, hidden_dim)
    state = jax.random.normal(k_state, (batch, state_dim), dtype=jnp.float32)

    mean, log_std = actor_forward(state, params)
    jax.block_until_ready((mean, log_std))

    ref_mean, ref_log_std = actor_forward_ref(state, params)
    assert mean.shape == (batch, action_dim)
    assert log_std.shape == (batch, action_dim)
    assert jnp.allclose(mean, ref_mean, atol=1e-2, rtol=1e-2)
    assert jnp.allclose(log_std, ref_log_std, atol=1e-2, rtol=1e-2)

    print("KERNEL_OK")
</pallas_src>

<mosaic_0001>
module attributes {stable_mosaic.version = 11 : i64} {
  func.func @actor_kernel(%arg0: i32, %arg1: memref<8x16xf32, #tpu.memory_space<vmem>>, %arg2: memref<16x256xbf16, #tpu.memory_space<vmem>>, %arg3: memref<1x256xf32, #tpu.memory_space<vmem>>, %arg4: memref<256x256xbf16, #tpu.memory_space<vmem>>, %arg5: memref<1x256xf32, #tpu.memory_space<vmem>>, %arg6: memref<256x256xbf16, #tpu.memory_space<vmem>>, %arg7: memref<1x256xf32, #tpu.memory_space<vmem>>, %arg8: memref<256x256xbf16, #tpu.memory_space<vmem>>, %arg9: memref<1x256xf32, #tpu.memory_space<vmem>>, %arg10: memref<256x16xbf16, #tpu.memory_space<vmem>>, %arg11: memref<1x16xf32, #tpu.memory_space<vmem>>, %arg12: memref<8x16xf32, #tpu.memory_space<vmem>>) attributes {dimension_semantics = [#tpu.dimension_semantics<parallel>], iteration_bounds = array<i64: 1>, scalar_prefetch = 0 : i64, scratch_operands = 0 : i64, tpu.core_type = #tpu.core_type<tc>, window_params = [{transform_indices = @transform_0, window_bounds = array<i64: 8, 16>}, {pipeline_mode = #tpu.pipeline_mode<synchronous>, transform_indices = @transform_1, window_bounds = array<i64: 16, 256>}, {pipeline_mode = #tpu.pipeline_mode<synchronous>, transform_indices = @transform_2, window_bounds = array<i64: 1, 256>}, {pipeline_mode = #tpu.pipeline_mode<synchronous>, transform_indices = @transform_3, window_bounds = array<i64: 256, 256>}, {pipeline_mode = #tpu.pipeline_mode<synchronous>, transform_indices = @transform_4, window_bounds = array<i64: 1, 256>}, {pipeline_mode = #tpu.pipeline_mode<synchronous>, transform_indices = @transform_5, window_bounds = array<i64: 256, 256>}, {pipeline_mode = #tpu.pipeline_mode<synchronous>, transform_indices = @transform_6, window_bounds = array<i64: 1, 256>}, {pipeline_mode = #tpu.pipeline_mode<synchronous>, transform_indices = @transform_7, window_bounds = array<i64: 256, 256>}, {pipeline_mode = #tpu.pipeline_mode<synchronous>, transform_indices = @transform_8, window_bounds = array<i64: 1, 256>}, {pipeline_mode = #tpu.pipeline_mode<synchronous>, transform_indices = @transform_9, window_bounds = array<i64: 256, 16>}, {pipeline_mode = #tpu.pipeline_mode<synchronous>, transform_indices = @transform_10, window_bounds = array<i64: 1, 16>}, {transform_indices = @transform_11, window_bounds = array<i64: 8, 16>}]} {
    %c0 = arith.constant 0 : index
    %c0_0 = arith.constant 0 : index
    %0 = vector.load %arg1[%c0, %c0_0] : memref<8x16xf32, #tpu.memory_space<vmem>>, vector<8x16xf32>
    %1 = arith.truncf %0 : vector<8x16xf32> to vector<8x16xbf16>
    %c0_1 = arith.constant 0 : index
    %c0_2 = arith.constant 0 : index
    %2 = vector.load %arg2[%c0_1, %c0_2] : memref<16x256xbf16, #tpu.memory_space<vmem>>, vector<16x256xbf16>
    %cst = arith.constant dense<0.000000e+00> : vector<8x256xf32>
    %3 = tpu.matmul %1, %2, %cst {dimension_numbers = #tpu.dot_dimension_numbers<[1], [0], [0], [1], [0, 0, 1, 1], [], []>} : vector<8x16xbf16>, vector<16x256xbf16>, vector<8x256xf32> -> vector<8x256xf32>
    %c0_3 = arith.constant 0 : index
    %c0_4 = arith.constant 0 : index
    %4 = vector.load %arg3[%c0_3, %c0_4] : memref<1x256xf32, #tpu.memory_space<vmem>>, vector<1x256xf32>
    %5 = vector.broadcast %4 : vector<1x256xf32> to vector<8x256xf32>
    %6 = arith.addf %3, %5 : vector<8x256xf32>
    %cst_5 = arith.constant 0.000000e+00 : f32
    %7 = vector.broadcast %cst_5 : f32 to vector<8x256xf32>
    %8 = arith.maximumf %6, %7 : vector<8x256xf32>
    %9 = arith.truncf %8 : vector<8x256xf32> to vector<8x256xbf16>
    %c0_6 = arith.constant 0 : index
    %c0_7 = arith.constant 0 : index
    %10 = vector.load %arg4[%c0_6, %c0_7] : memref<256x256xbf16, #tpu.memory_space<vmem>>, vector<256x256xbf16>
    %cst_8 = arith.constant dense<0.000000e+00> : vector<8x256xf32>
    %11 = tpu.matmul %9, %10, %cst_8 {dimension_numbers = #tpu.dot_dimension_numbers<[1], [0], [0], [1], [0, 0, 1, 1], [], []>} : vector<8x256xbf16>, vector<256x256xbf16>, vector<8x256xf32> -> vector<8x256xf32>
    %c0_9 = arith.constant 0 : index
    %c0_10 = arith.constant 0 : index
    %12 = vector.load %arg5[%c0_9, %c0_10] : memref<1x256xf32, #tpu.memory_space<vmem>>, vector<1x256xf32>
    %13 = vector.broadcast %12 : vector<1x256xf32> to vector<8x256xf32>
    %14 = arith.addf %11, %13 : vector<8x256xf32>
    %cst_11 = arith.constant 0.000000e+00 : f32
    %15 = vector.broadcast %cst_11 : f32 to vector<8x256xf32>
    %16 = arith.maximumf %14, %15 : vector<8x256xf32>
    %17 = arith.truncf %16 : vector<8x256xf32> to vector<8x256xbf16>
    %c0_12 = arith.constant 0 : index
    %c0_13 = arith.constant 0 : index
    %18 = vector.load %arg6[%c0_12, %c0_13] : memref<256x256xbf16, #tpu.memory_space<vmem>>, vector<256x256xbf16>
    %cst_14 = arith.constant dense<0.000000e+00> : vector<8x256xf32>
    %19 = tpu.matmul %17, %18, %cst_14 {dimension_numbers = #tpu.dot_dimension_numbers<[1], [0], [0], [1], [0, 0, 1, 1], [], []>} : vector<8x256xbf16>, vector<256x256xbf16>, vector<8x256xf32> -> vector<8x256xf32>
    %c0_15 = arith.constant 0 : index
    %c0_16 = arith.constant 0 : index
    %20 = vector.load %arg7[%c0_15, %c0_16] : memref<1x256xf32, #tpu.memory_space<vmem>>, vector<1x256xf32>
    %21 = vector.broadcast %20 : vector<1x256xf32> to vector<8x256xf32>
    %22 = arith.addf %19, %21 : vector<8x256xf32>
    %cst_17 = arith.constant 0.000000e+00 : f32
    %23 = vector.broadcast %cst_17 : f32 to vector<8x256xf32>
    %24 = arith.maximumf %22, %23 : vector<8x256xf32>
    %25 = arith.truncf %24 : vector<8x256xf32> to vector<8x256xbf16>
    %c0_18 = arith.constant 0 : index
    %c0_19 = arith.constant 0 : index
    %26 = vector.load %arg8[%c0_18, %c0_19] : memref<256x256xbf16, #tpu.memory_space<vmem>>, vector<256x256xbf16>
    %cst_20 = arith.constant dense<0.000000e+00> : vector<8x256xf32>
    %27 = tpu.matmul %25, %26, %cst_20 {dimension_numbers = #tpu.dot_dimension_numbers<[1], [0], [0], [1], [0, 0, 1, 1], [], []>} : vector<8x256xbf16>, vector<256x256xbf16>, vector<8x256xf32> -> vector<8x256xf32>
    %c0_21 = arith.constant 0 : index
    %c0_22 = arith.constant 0 : index
    %28 = vector.load %arg9[%c0_21, %c0_22] : memref<1x256xf32, #tpu.memory_space<vmem>>, vector<1x256xf32>
    %29 = vector.broadcast %28 : vector<1x256xf32> to vector<8x256xf32>
    %30 = arith.addf %27, %29 : vector<8x256xf32>
    %cst_23 = arith.constant 0.000000e+00 : f32
    %31 = vector.broadcast %cst_23 : f32 to vector<8x256xf32>
    %32 = arith.maximumf %30, %31 : vector<8x256xf32>
    %33 = arith.truncf %32 : vector<8x256xf32> to vector<8x256xbf16>
    %c0_24 = arith.constant 0 : index
    %c0_25 = arith.constant 0 : index
    %34 = vector.load %arg10[%c0_24, %c0_25] : memref<256x16xbf16, #tpu.memory_space<vmem>>, vector<256x16xbf16>
    %cst_26 = arith.constant dense<0.000000e+00> : vector<8x16xf32>
    %35 = tpu.matmul %33, %34, %cst_26 {dimension_numbers = #tpu.dot_dimension_numbers<[1], [0], [0], [1], [0, 0, 1, 1], [], []>} : vector<8x256xbf16>, vector<256x16xbf16>, vector<8x16xf32> -> vector<8x16xf32>
    %c0_27 = arith.constant 0 : index
    %c0_28 = arith.constant 0 : index
    %36 = vector.load %arg11[%c0_27, %c0_28] : memref<1x16xf32, #tpu.memory_space<vmem>>, vector<1x16xf32>
    %37 = vector.broadcast %36 : vector<1x16xf32> to vector<8x16xf32>
    %38 = arith.addf %35, %37 : vector<8x16xf32>
    %39 = tpu.iota {dimensions = array<i32: 1>} : vector<8x16xi32>
    %c8_i32 = arith.constant 8 : i32
    %40 = vector.broadcast %c8_i32 : i32 to vector<8x16xi32>
    %41 = arith.cmpi sge, %39, %40 : vector<8x16xi32>
    %cst_29 = arith.constant -1.000000e+01 : f32
    %cst_30 = arith.constant 2.000000e+00 : f32
    %42 = vector.broadcast %cst_29 : f32 to vector<8x16xf32>
    %43 = arith.maximumf %42, %38 : vector<8x16xf32>
    %44 = vector.broadcast %cst_30 : f32 to vector<8x16xf32>
    %45 = arith.minimumf %44, %43 : vector<8x16xf32>
    %46 = arith.select %41, %45, %38 : vector<8x16xi1>, vector<8x16xf32>
    %c0_31 = arith.constant 0 : index
    %c0_32 = arith.constant 0 : index
    %47 = vector.load %arg12[%c0_31, %c0_32] : memref<8x16xf32, #tpu.memory_space<vmem>>, vector<8x16xf32>
    tpu.vector_store %arg12[%c0_31, %c0_32], %46 {strides = array<i32>} : memref<8x16xf32, #tpu.memory_space<vmem>>, vector<8x16xf32>,
    return
  }
  func.func @transform_0(%arg0: i32) -> (i32, i32) {
    %c0_i32 = arith.constant 0 : i32
    %c0_i32_0 = arith.constant 0 : i32
    return %arg0, %c0_i32 : i32, i32
  }
  func.func @transform_1(%arg0: i32) -> (i32, i32) {
    %c0_i32 = arith.constant 0 : i32
    %c0_i32_0 = arith.constant 0 : i32
    %c0_i32_1 = arith.constant 0 : i32
    return %c0_i32, %c0_i32_0 : i32, i32
  }
  func.func @transform_2(%arg0: i32) -> (i32, i32) {
    %c0_i32 = arith.constant 0 : i32
    %c0_i32_0 = arith.constant 0 : i32
    %c0_i32_1 = arith.constant 0 : i32
    return %c0_i32, %c0_i32_0 : i32, i32
  }
  func.func @transform_3(%arg0: i32) -> (i32, i32) {
    %c0_i32 = arith.constant 0 : i32
    %c0_i32_0 = arith.constant 0 : i32
    %c0_i32_1 = arith.constant 0 : i32
    return %c0_i32, %c0_i32_0 : i32, i32
  }
  func.func @transform_4(%arg0: i32) -> (i32, i32) {
    %c0_i32 = arith.constant 0 : i32
    %c0_i32_0 = arith.constant 0 : i32
    %c0_i32_1 = arith.constant 0 : i32
    return %c0_i32, %c0_i32_0 : i32, i32
  }
  func.func @transform_5(%arg0: i32) -> (i32, i32) {
    %c0_i32 = arith.constant 0 : i32
    %c0_i32_0 = arith.constant 0 : i32
    %c0_i32_1 = arith.constant 0 : i32
    return %c0_i32, %c0_i32_0 : i32, i32
  }
  func.func @transform_6(%arg0: i32) -> (i32, i32) {
    %c0_i32 = arith.constant 0 : i32
    %c0_i32_0 = arith.constant 0 : i32
    %c0_i32_1 = arith.constant 0 : i32
    return %c0_i32, %c0_i32_0 : i32, i32
  }
  func.func @transform_7(%arg0: i32) -> (i32, i32) {
    %c0_i32 = arith.constant 0 : i32
    %c0_i32_0 = arith.constant 0 : i32
    %c0_i32_1 = arith.constant 0 : i32
    return %c0_i32, %c0_i32_0 : i32, i32
  }
  func.func @transform_8(%arg0: i32) -> (i32, i32) {
    %c0_i32 = arith.constant 0 : i32
    %c0_i32_0 = arith.constant 0 : i32
    %c0_i32_1 = arith.constant 0 : i32
    return %c0_i32, %c0_i32_0 : i32, i32
  }
  func.func @transform_9(%arg0: i32) -> (i32, i32) {
    %c0_i32 = arith.constant 0 : i32
    %c0_i32_0 = arith.constant 0 : i32
    %c0_i32_1 = arith.constant 0 : i32
    return %c0_i32, %c0_i32_0 : i32, i32
  }
  func.func @transform_10(%arg0: i32) -> (i32, i32) {
    %c0_i32 = arith.constant 0 : i32
    %c0_i32_0 = arith.constant 0 : i32
    %c0_i32_1 = arith.constant 0 : i32
    return %c0_i32, %c0_i32_0 : i32, i32
  }
  func.func @transform_11(%arg0: i32) -> (i32, i32) {
    %c0_i32 = arith.constant 0 : i32
    %c0_i32_0 = arith.constant 0 : i32
    return %arg0, %c0_i32 : i32, i32
  }
}

</mosaic_0001>

<llo_original>
// kernel: tpu_custom_call.1
$region0: #{tpu_custom_call.1}
  #allocation0 [shape = 'u32[]', space=smem, size = 0x4, offset = 0x4, fixed_abs, tag = 'smem constant byte address 0x4 - core index']
  #allocation1 [shape = 'u32[72,128]{1,0:T(1,128)}', space=vmem, size = 0x9000, scoped, tag = 'internal scratch']
  %s0 = inlined_call_operand.vmem [shape: f32[8,16], index: 0, kind: input, shape index: {}]
  %s1 = inlined_call_operand.vmem [shape: bf16[16,256], index: 1, kind: input, shape index: {}]
  %s2 = inlined_call_operand.vmem [shape: f32[1,256], index: 2, kind: input, shape index: {}]
  %s3 = inlined_call_operand.hbm [shape: bf16[256,256], index: 3, kind: input, shape index: {}]
  %s4 = inlined_call_operand.vmem [shape: f32[1,256], index: 4, kind: input, shape index: {}]
  %s5 = inlined_call_operand.hbm [shape: bf16[256,256], index: 5, kind: input, shape index: {}]
  %s6 = inlined_call_operand.vmem [shape: f32[1,256], index: 6, kind: input, shape index: {}]
  %s7 = inlined_call_operand.hbm [shape: bf16[256,256], index: 7, kind: input, shape index: {}]
  %s8 = inlined_call_operand.vmem [shape: f32[1,256], index: 8, kind: input, shape index: {}]
  %s9 = inlined_call_operand.vmem [shape: bf16[256,16], index: 9, kind: input, shape index: {}]
  %s10 = inlined_call_operand.vmem [shape: f32[1,16], index: 10, kind: input, shape index: {}]
  %s11 = inlined_call_operand.hbm [shape: f32[8,16], index: 11, kind: output, shape index: {}]
  %s12 = sld [smem:[#allocation0]]
  $region66: #{tpu_custom_call.1} parent=0
    _
  %s14 = ssub.s32 1, %s12
  %s15 = scalar_select 0, %s14, %s12
  $region1: #{tpu_custom_call.1} parent=0
    #allocation2 [shape = 'u8[131072]{0}', space=vmem, size = 0x20000, scoped, tag = 'input window, operand 3, single buffered']
    #allocation3 [shape = 's32[1]{0}', space=sflag, size = 0x4, scoped, tag = 'scoped memory for tpu_custom_call.1']
    #allocation4 [shape = 's32[1]{0}', space=sflag, size = 0x4, scoped, tag = 'scoped memory for tpu_custom_call.1']
    #allocation5 [shape = 'u8[131072]{0}', space=vmem, size = 0x20000, scoped, tag = 'input window, operand 5, single buffered']
    #allocation6 [shape = 's32[1]{0}', space=sflag, size = 0x4, scoped, tag = 'scoped memory for tpu_custom_call.1']
    #allocation7 [shape = 'u8[131072]{0}', space=vmem, size = 0x20000, scoped, tag = 'input window, operand 7, single buffered']
    #allocation8 [shape = 'u8[4096]{0}', space=vmem, size = 0x1000, scoped, tag = 'output window, operand 0, single buffered']
    %16 = vsyncpa [#allocation3], 0
    %17 = vsyncpa [#allocation6], 0
    %18 = vsyncpa [#allocation4], 0
    // Predicated region
    $region2: #{tpu_custom_call.1} parent=1 // pred_check
      _
    $region3: #{tpu_custom_call.1} parent=1 // pred_check_branch
      %20 = sbr.rel (0) target = $region5
    $region4: #{tpu_custom_call.1} parent=1 // pred_region
      _
    $region5: #{tpu_custom_call.1} parent=1 // pred_fallthru
      _
    // Predicated region
    $region6: #{tpu_custom_call.1} parent=1 // pred_check
      _
    $region7: #{tpu_custom_call.1} parent=1 // pred_check_branch
      %22 = sbr.rel (0) target = $region9
    $region8: #{tpu_custom_call.1} parent=1 // pred_region
      _
    $region9: #{tpu_custom_call.1} parent=1 // pred_fallthru
      _
    // Predicated region
    $region10: #{tpu_custom_call.1} parent=1 // pred_check
      _
    $region11: #{tpu_custom_call.1} parent=1 // pred_check_branch
      %24 = sbr.rel (0) target = $region13
    $region12: #{tpu_custom_call.1} parent=1 // pred_region
      _
    $region13: #{tpu_custom_call.1} parent=1 // pred_fallthru
      _
    // Predicated region
    $region14: #{tpu_custom_call.1} parent=1 // pred_check
      _
    $region15: #{tpu_custom_call.1} parent=1 // pred_check_branch
      %26 = sbr.rel (0) target = $region17
    $region16: #{tpu_custom_call.1} parent=1 // pred_region
      %28 = vsyncadd [#allocation3], 0
      %s29 = sshll.u32 %s3, 4
      %s30 = int_to_ptr.hbm [resolvable:$true] %s29
      %s31 = sshll.u32 [#allocation2], 4
      %s32 = int_to_ptr.vmem [resolvable:$true] %s31
      %37 = dma.hbm_to_vmem [thread:$0]  %s30, 4096, %s32, [#allocation3], 128, 128, 8
    $region17: #{tpu_custom_call.1} parent=1 // pred_fallthru
      _
    // Predicated region
    $region18: #{tpu_custom_call.1} parent=1 // pred_check
      _
    $region19: #{tpu_custom_call.1} parent=1 // pred_check_branch
      %39 = sbr.rel (0) target = $region21
    $region20: #{tpu_custom_call.1} parent=1 // pred_region
      _
    $region21: #{tpu_custom_call.1} parent=1 // pred_fallthru
      _
    // Predicated region
    $region22: #{tpu_custom_call.1} parent=1 // pred_check
      _
    $region23: #{tpu_custom_call.1} parent=1 // pred_check_branch
      %41 = sbr.rel (0) target = $region25
    $region24: #{tpu_custom_call.1} parent=1 // pred_region
      %43 = vsyncadd [#allocation6], 0
      %s44 = sshll.u32 %s5, 4
      %s45 = int_to_ptr.hbm [resolvable:$true] %s44
      %s46 = sshll.u32 [#allocation5], 4
      %s47 = int_to_ptr.vmem [resolvable:$true] %s46
      %52 = dma.hbm_to_vmem [thread:$0]  %s45, 4096, %s47, [#allocation6], 128, 128, 8
    $region25: #{tpu_custom_call.1} parent=1 // pred_fallthru
      _
    // Predicated region
    $region26: #{tpu_custom_call.1} parent=1 // pred_check
      _
    $region27: #{tpu_custom_call.1} parent=1 // pred_check_branch
      %54 = sbr.rel (0) target = $region29
    $region28: #{tpu_custom_call.1} parent=1 // pred_region
      _
    $region29: #{tpu_custom_call.1} parent=1 // pred_fallthru
      _
    // Predicated region
    $region30: #{tpu_custom_call.1} parent=1 // pred_check
      _
    $region31: #{tpu_custom_call.1} parent=1 // pred_check_branch
      %56 = sbr.rel (0) target = $region33
    $region32: #{tpu_custom_call.1} parent=1 // pred_region
      %58 = vsyncadd [#allocation6], 0
      %s59 = sshll.u32 %s7, 4
      %s60 = int_to_ptr.hbm [resolvable:$true] %s59
      %s61 = sshll.u32 [#allocation7], 4
      %s62 = int_to_ptr.vmem [resolvable:$true] %s61
      %67 = dma.hbm_to_vmem [thread:$0]  %s60, 4096, %s62, [#allocation6], 128, 128, 8
    $region33: #{tpu_custom_call.1} parent=1 // pred_fallthru
      _
    // Predicated region
    $region34: #{tpu_custom_call.1} parent=1 // pred_check
      _
    $region35: #{tpu_custom_call.1} parent=1 // pred_check_branch
      %69 = sbr.rel (0) target = $region37
    $region36: #{tpu_custom_call.1} parent=1 // pred_region
      _
    $region37: #{tpu_custom_call.1} parent=1 // pred_fallthru
      _
    // Predicated region
    $region38: #{tpu_custom_call.1} parent=1 // pred_check
      _
    $region39: #{tpu_custom_call.1} parent=1 // pred_check_branch
      %71 = sbr.rel (0) target = $region41
    $region40: #{tpu_custom_call.1} parent=1 // pred_region
      _
    $region41: #{tpu_custom_call.1} parent=1 // pred_fallthru
      _
    // Predicated region
    $region42: #{tpu_custom_call.1} parent=1 // pred_check
      _
    $region43: #{tpu_custom_call.1} parent=1 // pred_check_branch
      %73 = sbr.rel (0) target = $region45
    $region44: #{tpu_custom_call.1} parent=1 // pred_region
      _
    $region45: #{tpu_custom_call.1} parent=1 // pred_fallthru
      _
    // Predicated region
    $region46: #{tpu_custom_call.1} parent=1 // pred_check
      _
    $region47: #{tpu_custom_call.1} parent=1 // pred_check_branch
      %75 = sbr.rel (0) target = $region49
    $region48: #{tpu_custom_call.1} parent=1 // pred_region
      %77 = dma.done [#allocation3], 4096
    $region49: #{tpu_custom_call.1} parent=1 // pred_fallthru
      _
    // Predicated region
    $region50: #{tpu_custom_call.1} parent=1 // pred_check
      _
    $region51: #{tpu_custom_call.1} parent=1 // pred_check_branch
      %79 = sbr.rel (0) target = $region53
    $region52: #{tpu_custom_call.1} parent=1 // pred_region
      %81 = dma.done [#allocation6], 4096
    $region53: #{tpu_custom_call.1} parent=1 // pred_fallthru
      _
    // Predicated region
    $region54: #{tpu_custom_call.1} parent=1 // pred_check
      _
    $region55: #{tpu_custom_call.1} parent=1 // pred_check_branch
      %83 = sbr.rel (0) target = $region57
    $region56: #{tpu_custom_call.1} parent=1 // pred_region
      %85 = dma.done [#allocation6], 4096
    $region57: #{tpu_custom_call.1} parent=1 // pred_fallthru
      _
    %v87 = vld [vmem:[%s0] sm:$0xff]
    %v88 = vpack.c.bf16 %v87, %v87
    %v89 = vld [vmem:[%s1] sm:$0xff]
    %v90 = vld [vmem:[%s1 + $0x8] sm:$0xff]
    %v91 = vld [vmem:[%s2] sm:$0x3]
    %v93 = vperm.slane %v91, 0
    %v94 = vperm.slane %v91, 1
    %v99 = vunpack.c.l.b16 %v89
    %v100 = vunpack.c.h.b16 %v89
    %v101 = vunpack.c.l.b16 %v90
    %v102 = vunpack.c.h.b16 %v90
    %v103 = vpack.c.b16 %v101, %v99
    %v104 = vpack.c.b16 %v102, %v100
    %vm107 = vcmask 130048
    %v109 = vsel %vm107, %v88, 0
    %111 = vmatpush.bf16.msra.mxu0 0
    %112 = vmatpush.bf16.msra.mxu0 0
    %113 = vmatpush.bf16.msra.mxu0 0
    %114 = vmatpush.bf16.msra.mxu0 0
    %115 = vmatpush.bf16.msra.mxu0 0
    %116 = vmatpush.bf16.msra.mxu0 0
    %117 = vmatpush.bf16.msra.mxu0 0
    %118 = vmatpush.bf16.msra.mxu0 %v103
    %119 = vmatmul.bf16.gmra.mxu0 %v109
    %v120 = vpop.f32.mrf.mxu0
    %v121 = vadd.f32 %v93, %v120
    %v122 = vpop.f32.mrf.mxu0
    %123 = vdwg.mxu0
    %124 = vmatpush.bf16.msra.mxu0 0
    %125 = vmatpush.bf16.msra.mxu0 0
    %126 = vmatpush.bf16.msra.mxu0 0
    %127 = vmatpush.bf16.msra.mxu0 0
    %128 = vmatpush.bf16.msra.mxu0 0
    %129 = vmatpush.bf16.msra.mxu0 0
    %130 = vmatpush.bf16.msra.mxu0 0
    %131 = vmatpush.bf16.msra.mxu0 %v104
    %132 = vmatmul.bf16.gmra.mxu0 %v109
    %v133 = vpop.f32.mrf.mxu0
    %v134 = vadd.f32 %v94, %v133
    %v135 = vpop.f32.mrf.mxu0
    %136 = vdwg.mxu0
    %v137 = vmax.f32 %v121, 0.0
    %v138 = vmax.f32 %v134, 0.0
    %v139 = vpack.c.bf16 %v137, %v137
    %v140 = vpack.c.bf16 %v138, %v138
    %v141 = vld [vmem:[#allocation2] sm:$0xff]
    %v142 = vld [vmem:[#allocation2 + $0x8] sm:$0xff]
    %v143 = vld [vmem:[#allocation2 + $0x10] sm:$0xff]
    %v144 = vld [vmem:[#allocation2 + $0x18] sm:$0xff]
    %v145 = vld [vmem:[#allocation2 + $0x20] sm:$0xff]
    %v146 = vld [vmem:[#allocation2 + $0x28] sm:$0xff]
    %v147 = vld [vmem:[#allocation2 + $0x30] sm:$0xff]
    %v148 = vld [vmem:[#allocation2 + $0x38] sm:$0xff]
    %v149 = vld [vmem:[#allocation2 + $0x40] sm:$0xff]
    %v150 = vld [vmem:[#allocation2 + $0x48] sm:$0xff]
    %v151 = vld [vmem:[#allocation2 + $0x50] sm:$0xff]
    %v152 = vld [vmem:[#allocation2 + $0x58] sm:$0xff]
    %v153 = vld [vmem:[#allocation2 + $0x60] sm:$0xff]
    %v154 = vld [vmem:[#allocation2 + $0x68] sm:$0xff]
    %v155 = vld [vmem:[#allocation2 + $0x70] sm:$0xff]
    %v156 = vld [vmem:[#allocation2 + $0x78] sm:$0xff]
    %v157 = vld [vmem:[#allocation2 + $0x80] sm:$0xff]
    %v158 = vld [vmem:[#allocation2 + $0x88] sm:$0xff]
    %v159 = vld [vmem:[#allocation2 + $0x90] sm:$0xff]
    %v160 = vld [vmem:[#allocation2 + $0x98] sm:$0xff]
    %v161 = vld [vmem:[#allocation2 + $0xa0] sm:$0xff]
    %v162 = vld [vmem:[#allocation2 + $0xa8] sm:$0xff]
    %v163 = vld [vmem:[#allocation2 + $0xb0] sm:$0xff]
    %v164 = vld [vmem:[#allocation2 + $0xb8] sm:$0xff]
    %v165 = vld [vmem:[#allocation2 + $0xc0] sm:$0xff]
    %v166 = vld [vmem:[#allocation2 + $0xc8] sm:$0xff]
    %v167 = vld [vmem:[#allocation2 + $0xd0] sm:$0xff]
    %v168 = vld [vmem:[#allocation2 + $0xd8] sm:$0xff]
    %v169 = vld [vmem:[#allocation2 + $0xe0] sm:$0xff]
    %v170 = vld [vmem:[#allocation2 + $0xe8] sm:$0xff]
    %v171 = vld [vmem:[#allocation2 + $0xf0] sm:$0xff]
    %v172 = vld [vmem:[#allocation2 + $0xf8] sm:$0xff]
    %v173 = vld [vmem:[%s4] sm:$0x3]
    %v175 = vperm.slane %v173, 0
    %v176 = vperm.slane %v173, 1
    %v211 = vunpack.c.l.b16 %v141
    %v212 = vunpack.c.h.b16 %v141
    %v213 = vunpack.c.l.b16 %v142
    %v214 = vunpack.c.h.b16 %v142
    %v215 = vunpack.c.l.b16 %v143
    %v216 = vunpack.c.h.b16 %v143
    %v217 = vunpack.c.l.b16 %v144
    %v218 = vunpack.c.h.b16 %v144
    %v219 = vunpack.c.l.b16 %v145
    %v220 = vunpack.c.h.b16 %v145
    %v221 = vunpack.c.l.b16 %v146
    %v222 = vunpack.c.h.b16 %v146
    %v223 = vunpack.c.l.b16 %v147
    %v224 = vunpack.c.h.b16 %v147
    %v225 = vunpack.c.l.b16 %v148
    %v226 = vunpack.c.h.b16 %v148
    %v227 = vunpack.c.l.b16 %v149
    %v228 = vunpack.c.h.b16 %v149
    %v229 = vunpack.c.l.b16 %v150
    %v230 = vunpack.c.h.b16 %v150
    %v231 = vunpack.c.l.b16 %v151
    %v232 = vunpack.c.h.b16 %v151
    %v233 = vunpack.c.l.b16 %v152
    %v234 = vunpack.c.h.b16 %v152
    %v235 = vunpack.c.l.b16 %v153
    %v236 = vunpack.c.h.b16 %v153
    %v237 = vunpack.c.l.b16 %v154
    %v238 = vunpack.c.h.b16 %v154
    %v239 = vunpack.c.l.b16 %v155
    %v240 = vunpack.c.h.b16 %v155
    %v241 = vunpack.c.l.b16 %v156
    %v242 = vunpack.c.h.b16 %v156
    %v243 = vunpack.c.l.b16 %v157
    %v244 = vunpack.c.h.b16 %v157
    %v245 = vunpack.c.l.b16 %v158
    %v246 = vunpack.c.h.b16 %v158
    %v247 = vunpack.c.l.b16 %v159
    %v248 = vunpack.c.h.b16 %v159
    %v249 = vunpack.c.l.b16 %v160
    %v250 = vunpack.c.h.b16 %v160
    %v251 = vunpack.c.l.b16 %v161
    %v252 = vunpack.c.h.b16 %v161
    %v253 = vunpack.c.l.b16 %v162
    %v254 = vunpack.c.h.b16 %v162
    %v255 = vunpack.c.l.b16 %v163
    %v256 = vunpack.c.h.b16 %v163
    %v257 = vunpack.c.l.b16 %v164
    %v258 = vunpack.c.h.b16 %v164
    %v259 = vunpack.c.l.b16 %v165
    %v260 = vunpack.c.h.b16 %v165
    %v261 = vunpack.c.l.b16 %v166
    %v262 = vunpack.c.h.b16 %v166
    %v263 = vunpack.c.l.b16 %v167
    %v264 = vunpack.c.h.b16 %v167
    %v265 = vunpack.c.l.b16 %v168
    %v266 = vunpack.c.h.b16 %v168
    %v267 = vunpack.c.l.b16 %v169
    %v268 = vunpack.c.h.b16 %v169
    %v269 = vunpack.c.l.b16 %v170
    %v270 = vunpack.c.h.b16 %v170
    %v271 = vunpack.c.l.b16 %v171
    %v272 = vunpack.c.h.b16 %v171
    %v273 = vunpack.c.l.b16 %v172
    %v274 = vunpack.c.h.b16 %v172
    %v275 = vpack.c.b16 %v213, %v211
    %v276 = vpack.c.b16 %v214, %v212
    %v277 = vpack.c.b16 %v217, %v215
    %v278 = vpack.c.b16 %v218, %v216
    %v279 = vpack.c.b16 %v221, %v219
    %v280 = vpack.c.b16 %v222, %v220
    %v281 = vpack.c.b16 %v225, %v223
    %v282 = vpack.c.b16 %v226, %v224
    %v283 = vpack.c.b16 %v229, %v227
    %v284 = vpack.c.b16 %v230, %v228
    %v285 = vpack.c.b16 %v233, %v231
    %v286 = vpack.c.b16 %v234, %v232
    %v287 = vpack.c.b16 %v237, %v235
    %v288 = vpack.c.b16 %v238, %v236
    %v289 = vpack.c.b16 %v241, %v239
    %v290 = vpack.c.b16 %v242, %v240
    %v291 = vpack.c.b16 %v245, %v243
    %v292 = vpack.c.b16 %v246, %v244
    %v293 = vpack.c.b16 %v249, %v247
    %v294 = vpack.c.b16 %v250, %v248
    %v295 = vpack.c.b16 %v253, %v251
    %v296 = vpack.c.b16 %v254, %v252
    %v297 = vpack.c.b16 %v257, %v255
    %v298 = vpack.c.b16 %v258, %v256
    %v299 = vpack.c.b16 %v261, %v259
    %v300 = vpack.c.b16 %v262, %v260
    %v301 = vpack.c.b16 %v265, %v263
    %v302 = vpack.c.b16 %v266, %v264
    %v303 = vpack.c.b16 %v269, %v267
    %v304 = vpack.c.b16 %v270, %v268
    %v305 = vpack.c.b16 %v273, %v271
    %v306 = vpack.c.b16 %v274, %v272
    %339 = vmatpush.bf16.msra.mxu0 %v289
    %340 = vmatpush.bf16.msra.mxu0 %v287
    %341 = vmatpush.bf16.msra.mxu0 %v285
    %342 = vmatpush.bf16.msra.mxu0 %v283
    %343 = vmatpush.bf16.msra.mxu0 %v281
    %344 = vmatpush.bf16.msra.mxu0 %v279
    %345 = vmatpush.bf16.msra.mxu0 %v277
    %346 = vmatpush.bf16.msra.mxu0 %v275
    %347 = vmatmul.bf16.gmra.mxu0 %v139
    %v348 = vpop.f32.mrf.mxu0
    %v349 = vadd.f32 %v175, %v348
    %v350 = vpop.f32.mrf.mxu0
    %351 = vdwg.mxu0
    %352 = vmatpush.bf16.msra.mxu0 %v305
    %353 = vmatpush.bf16.msra.mxu0 %v303
    %354 = vmatpush.bf16.msra.mxu0 %v301
    %355 = vmatpush.bf16.msra.mxu0 %v299
    %356 = vmatpush.bf16.msra.mxu0 %v297
    %357 = vmatpush.bf16.msra.mxu0 %v295
    %358 = vmatpush.bf16.msra.mxu0 %v293
    %359 = vmatpush.bf16.msra.mxu0 %v291
    %360 = vmatmul.bf16.gmra.mxu0 %v140
    %v361 = vpop.f32.mrf.mxu0
    %v362 = vadd.f32 %v349, %v361
    %v363 = vpop.f32.mrf.mxu0
    %364 = vdwg.mxu0
    %365 = vmatpush.bf16.msra.mxu0 %v290
    %366 = vmatpush.bf16.msra.mxu0 %v288
    %367 = vmatpush.bf16.msra.mxu0 %v286
    %368 = vmatpush.bf16.msra.mxu0 %v284
    %369 = vmatpush.bf16.msra.mxu0 %v282
    %370 = vmatpush.bf16.msra.mxu0 %v280
    %371 = vmatpush.bf16.msra.mxu0 %v278
    %372 = vmatpush.bf16.msra.mxu0 %v276
    %373 = vmatmul.bf16.gmra.mxu0 %v139
    %v374 = vpop.f32.mrf.mxu0
    %v375 = vadd.f32 %v176, %v374
    %v376 = vpop.f32.mrf.mxu0
    %377 = vdwg.mxu0
    %378 = vmatpush.bf16.msra.mxu0 %v306
    %379 = vmatpush.bf16.msra.mxu0 %v304
    %380 = vmatpush.bf16.msra.mxu0 %v302
    %381 = vmatpush.bf16.msra.mxu0 %v300
    %382 = vmatpush.bf16.msra.mxu0 %v298
    %383 = vmatpush.bf16.msra.mxu0 %v296
    %384 = vmatpush.bf16.msra.mxu0 %v294
    %385 = vmatpush.bf16.msra.mxu0 %v292
    %386 = vmatmul.bf16.gmra.mxu0 %v140
    %v387 = vpop.f32.mrf.mxu0
    %v388 = vadd.f32 %v375, %v387
    %v389 = vpop.f32.mrf.mxu0
    %390 = vdwg.mxu0
    %v391 = vmax.f32 %v362, 0.0
    %v392 = vmax.f32 %v388, 0.0
    %v393 = vpack.c.bf16 %v391, %v391
    %v394 = vpack.c.bf16 %v392, %v392
    %v395 = vld [vmem:[#allocation5] sm:$0xff]
    %v396 = vld [vmem:[#allocation5 + $0x8] sm:$0xff]
    %v397 = vld [vmem:[#allocation5 + $0x10] sm:$0xff]
    %v398 = vld [vmem:[#allocation5 + $0x18] sm:$0xff]
    %v399 = vld [vmem:[#allocation5 + $0x20] sm:$0xff]
    %v400 = vld [vmem:[#allocation5 + $0x28] sm:$0xff]
    %v401 = vld [vmem:[#allocation5 + $0x30] sm:$0xff]
    %v402 = vld [vmem:[#allocation5 + $0x38] sm:$0xff]
    %v403 = vld [vmem:[#allocation5 + $0x40] sm:$0xff]
    %v404 = vld [vmem:[#allocation5 + $0x48] sm:$0xff]
    %v405 = vld [vmem:[#allocation5 + $0x50] sm:$0xff]
    %v406 = vld [vmem:[#allocation5 + $0x58] sm:$0xff]
    %v407 = vld [vmem:[#allocation5 + $0x60] sm:$0xff]
    %v408 = vld [vmem:[#allocation5 + $0x68] sm:$0xff]
    %v409 = vld [vmem:[#allocation5 + $0x70] sm:$0xff]
    %v410 = vld [vmem:[#allocation5 + $0x78] sm:$0xff]
    %v411 = vld [vmem:[#allocation5 + $0x80] sm:$0xff]
    %v412 = vld [vmem:[#allocation5 + $0x88] sm:$0xff]
    %v413 = vld [vmem:[#allocation5 + $0x90] sm:$0xff]
    %v414 = vld [vmem:[#allocation5 + $0x98] sm:$0xff]
    %v415 = vld [vmem:[#allocation5 + $0xa0] sm:$0xff]
    %v416 = vld [vmem:[#allocation5 + $0xa8] sm:$0xff]
    %v417 = vld [vmem:[#allocation5 + $0xb0] sm:$0xff]
    %v418 = vld [vmem:[#allocation5 + $0xb8] sm:$0xff]
    %v419 = vld [vmem:[#allocation5 + $0xc0] sm:$0xff]
    %v420 = vld [vmem:[#allocation5 + $0xc8] sm:$0xff]
    %v421 = vld [vmem:[#allocation5 + $0xd0] sm:$0xff]
    %v422 = vld [vmem:[#allocation5 + $0xd8] sm:$0xff]
    %v423 = vld [vmem:[#allocation5 + $0xe0] sm:$0xff]
    %v424 = vld [vmem:[#allocation5 + $0xe8] sm:$0xff]
    %v425 = vld [vmem:[#allocation5 + $0xf0] sm:$0xff]
    %v426 = vld [vmem:[#allocation5 + $0xf8] sm:$0xff]
    %v427 = vld [vmem:[%s6] sm:$0x3]
    %v429 = vperm.slane %v427, 0
    %v430 = vperm.slane %v427, 1
    %v465 = vunpack.c.l.b16 %v395
    %v466 = vunpack.c.h.b16 %v395
    %v467 = vunpack.c.l.b16 %v396
    %v468 = vunpack.c.h.b16 %v396
    %v469 = vunpack.c.l.b16 %v397
    %v470 = vunpack.c.h.b16 %v397
    %v471 = vunpack.c.l.b16 %v398
    %v472 = vunpack.c.h.b16 %v398
    %v473 = vunpack.c.l.b16 %v399
    %v474 = vunpack.c.h.b16 %v399
    %v475 = vunpack.c.l.b16 %v400
    %v476 = vunpack.c.h.b16 %v400
    %v477 = vunpack.c.l.b16 %v401
    %v478 = vunpack.c.h.b16 %v401
    %v479 = vunpack.c.l.b16 %v402
    %v480 = vunpack.c.h.b16 %v402
    %v481 = vunpack.c.l.b16 %v403
    %v482 = vunpack.c.h.b16 %v403
    %v483 = vunpack.c.l.b16 %v404
    %v484 = vunpack.c.h.b16 %v404
    %v485 = vunpack.c.l.b16 %v405
    %v486 = vunpack.c.h.b16 %v405
    %v487 = vunpack.c.l.b16 %v406
    %v488 = vunpack.c.h.b16 %v406
    %v489 = vunpack.c.l.b16 %v407
    %v490 = vunpack.c.h.b16 %v407
    %v491 = vunpack.c.l.b16 %v408
    %v492 = vunpack.c.h.b16 %v408
    %v493 = vunpack.c.l.b16 %v409
    %v494 = vunpack.c.h.b16 %v409
    %v495 = vunpack.c.l.b16 %v410
    %v496 = vunpack.c.h.b16 %v410
    %v497 = vunpack.c.l.b16 %v411
    %v498 = vunpack.c.h.b16 %v411
    %v499 = vunpack.c.l.b16 %v412
    %v500 = vunpack.c.h.b16 %v412
    %v501 = vunpack.c.l.b16 %v413
    %v502 = vunpack.c.h.b16 %v413
    %v503 = vunpack.c.l.b16 %v414
    %v504 = vunpack.c.h.b16 %v414
    %v505 = vunpack.c.l.b16 %v415
    %v506 = vunpack.c.h.b16 %v415
    %v507 = vunpack.c.l.b16 %v416
    %v508 = vunpack.c.h.b16 %v416
    %v509 = vunpack.c.l.b16 %v417
    %v510 = vunpack.c.h.b16 %v417
    %v511 = vunpack.c.l.b16 %v418
    %v512 = vunpack.c.h.b16 %v418
    %v513 = vunpack.c.l.b16 %v419
    %v514 = vunpack.c.h.b16 %v419
    %v515 = vunpack.c.l.b16 %v420
    %v516 = vunpack.c.h.b16 %v420
    %v517 = vunpack.c.l.b16 %v421
    %v518 = vunpack.c.h.b16 %v421
    %v519 = vunpack.c.l.b16 %v422
    %v520 = vunpack.c.h.b16 %v422
    %v521 = vunpack.c.l.b16 %v423
    %v522 = vunpack.c.h.b16 %v423
    %v523 = vunpack.c.l.b16 %v424
    %v524 = vunpack.c.h.b16 %v424
    %v525 = vunpack.c.l.b16 %v425
    %v526 = vunpack.c.h.b16 %v425
    %v527 = vunpack.c.l.b16 %v426
    %v528 = vunpack.c.h.b16 %v426
    %v529 = vpack.c.b16 %v467, %v465
    %v530 = vpack.c.b16 %v468, %v466
    %v531 = vpack.c.b16 %v471, %v469
    %v532 = vpack.c.b16 %v472, %v470
    %v533 = vpack.c.b16 %v475, %v473
    %v534 = vpack.c.b16 %v476, %v474
    %v535 = vpack.c.b16 %v479, %v477
    %v536 = vpack.c.b16 %v480, %v478
    %v537 = vpack.c.b16 %v483, %v481
    %v538 = vpack.c.b16 %v484, %v482
    %v539 = vpack.c.b16 %v487, %v485
    %v540 = vpack.c.b16 %v488, %v486
    %v541 = vpack.c.b16 %v491, %v489
    %v542 = vpack.c.b16 %v492, %v490
    %v543 = vpack.c.b16 %v495, %v493
    %v544 = vpack.c.b16 %v496, %v494
    %v545 = vpack.c.b16 %v499, %v497
    %v546 = vpack.c.b16 %v500, %v498
    %v547 = vpack.c.b16 %v503, %v501
    %v548 = vpack.c.b16 %v504, %v502
    %v549 = vpack.c.b16 %v507, %v505
    %v550 = vpack.c.b16 %v508, %v506
    %v551 = vpack.c.b16 %v511, %v509
    %v552 = vpack.c.b16 %v512, %v510
    %v553 = vpack.c.b16 %v515, %v513
    %v554 = vpack.c.b16 %v516, %v514
    %v555 = vpack.c.b16 %v519, %v517
    %v556 = vpack.c.b16 %v520, %v518
    %v557 = vpack.c.b16 %v523, %v521
    %v558 = vpack.c.b16 %v524, %v522
    %v559 = vpack.c.b16 %v527, %v525
    %v560 = vpack.c.b16 %v528, %v526
    %593 = vmatpush.bf16.msra.mxu0 %v543
    %594 = vmatpush.bf16.msra.mxu0 %v541
    %595 = vmatpush.bf16.msra.mxu0 %v539
    %596 = vmatpush.bf16.msra.mxu0 %v537
    %597 = vmatpush.bf16.msra.mxu0 %v535
    %598 = vmatpush.bf16.msra.mxu0 %v533
    %599 = vmatpush.bf16.msra.mxu0 %v531
    %600 = vmatpush.bf16.msra.mxu0 %v529
    %601 = vmatmul.bf16.gmra.mxu0 %v393
    %v602 = vpop.f32.mrf.mxu0
    %v603 = vadd.f32 %v429, %v602
    %v604 = vpop.f32.mrf.mxu0
    %605 = vdwg.mxu0
    %606 = vmatpush.bf16.msra.mxu0 %v559
    %607 = vmatpush.bf16.msra.mxu0 %v557
    %608 = vmatpush.bf16.msra.mxu0 %v555
    %609 = vmatpush.bf16.msra.mxu0 %v553
    %610 = vmatpush.bf16.msra.mxu0 %v551
    %611 = vmatpush.bf16.msra.mxu0 %v549
    %612 = vmatpush.bf16.msra.mxu0 %v547
    %613 = vmatpush.bf16.msra.mxu0 %v545
    %614 = vmatmul.bf16.gmra.mxu0 %v394
    %v615 = vpop.f32.mrf.mxu0
    %v616 = vadd.f32 %v603, %v615
    %v617 = vpop.f32.mrf.mxu0
    %618 = vdwg.mxu0
    %619 = vmatpush.bf16.msra.mxu0 %v544
    %620 = vmatpush.bf16.msra.mxu0 %v542
    %621 = vmatpush.bf16.msra.mxu0 %v540
    %622 = vmatpush.bf16.msra.mxu0 %v538
    %623 = vmatpush.bf16.msra.mxu0 %v536
    %624 = vmatpush.bf16.msra.mxu0 %v534
    %625 = vmatpush.bf16.msra.mxu0 %v532
    %626 = vmatpush.bf16.msra.mxu0 %v530
    %627 = vmatmul.bf16.gmra.mxu0 %v393
    %v628 = vpop.f32.mrf.mxu0
    %v629 = vadd.f32 %v430, %v628
    %v630 = vpop.f32.mrf.mxu0
    %631 = vdwg.mxu0
    %632 = vmatpush.bf16.msra.mxu0 %v560
    %633 = vmatpush.bf16.msra.mxu0 %v558
    %634 = vmatpush.bf16.msra.mxu0 %v556
    %635 = vmatpush.bf16.msra.mxu0 %v554
    %636 = vmatpush.bf16.msra.mxu0 %v552
    %637 = vmatpush.bf16.msra.mxu0 %v550
    %638 = vmatpush.bf16.msra.mxu0 %v548
    %639 = vmatpush.bf16.msra.mxu0 %v546
    %640 = vmatmul.bf16.gmra.mxu0 %v394
    %v641 = vpop.f32.mrf.mxu0
    %v642 = vadd.f32 %v629, %v641
    %v643 = vpop.f32.mrf.mxu0
    %644 = vdwg.mxu0
    %v645 = vmax.f32 %v616, 0.0
    %v646 = vmax.f32 %v642, 0.0
    %v647 = vpack.c.bf16 %v645, %v645
    %v648 = vpack.c.bf16 %v646, %v646
    %v649 = vld [vmem:[#allocation7] sm:$0xff]
    %v650 = vld [vmem:[#allocation7 + $0x8] sm:$0xff]
    %v651 = vld [vmem:[#allocation7 + $0x10] sm:$0xff]
    %v652 = vld [vmem:[#allocation7 + $0x18] sm:$0xff]
    %v653 = vld [vmem:[#allocation7 + $0x20] sm:$0xff]
    %v654 = vld [vmem:[#allocation7 + $0x28] sm:$0xff]
    %v655 = vld [vmem:[#allocation7 + $0x30] sm:$0xff]
    %v656 = vld [vmem:[#allocation7 + $0x38] sm:$0xff]
    %v657 = vld [vmem:[#allocation7 + $0x40] sm:$0xff]
    %v658 = vld [vmem:[#allocation7 + $0x48] sm:$0xff]
    %v659 = vld [vmem:[#allocation7 + $0x50] sm:$0xff]
    %v660 = vld [vmem:[#allocation7 + $0x58] sm:$0xff]
    %v661 = vld [vmem:[#allocation7 + $0x60] sm:$0xff]
    %v662 = vld [vmem:[#allocation7 + $0x68] sm:$0xff]
    %v663 = vld [vmem:[#allocation7 + $0x70] sm:$0xff]
    %v664 = vld [vmem:[#allocation7 + $0x78] sm:$0xff]
    %v665 = vld [vmem:[#allocation7 + $0x80] sm:$0xff]
    %v666 = vld [vmem:[#allocation7 + $0x88] sm:$0xff]
    %v667 = vld [vmem:[#allocation7 + $0x90] sm:$0xff]
    %v668 = vld [vmem:[#allocation7 + $0x98] sm:$0xff]
    %v669 = vld [vmem:[#allocation7 + $0xa0] sm:$0xff]
    %v670 = vld [vmem:[#allocation7 + $0xa8] sm:$0xff]
    %v671 = vld [vmem:[#allocation7 + $0xb0] sm:$0xff]
    %v672 = vld [vmem:[#allocation7 + $0xb8] sm:$0xff]
    %v673 = vld [vmem:[#allocation7 + $0xc0] sm:$0xff]
    %v674 = vld [vmem:[#allocation7 + $0xc8] sm:$0xff]
    %v675 = vld [vmem:[#allocation7 + $0xd0] sm:$0xff]
    %v676 = vld [vmem:[#allocation7 + $0xd8] sm:$0xff]
    %v677 = vld [vmem:[#allocation7 + $0xe0] sm:$0xff]
    %v678 = vld [vmem:[#allocation7 + $0xe8] sm:$0xff]
    %v679 = vld [vmem:[#allocation7 + $0xf0] sm:$0xff]
    %v680 = vld [vmem:[#allocation7 + $0xf8] sm:$0xff]
    %v681 = vld [vmem:[%s8] sm:$0x3]
    %v683 = vperm.slane %v681, 0
    %v684 = vperm.slane %v681, 1
    %v719 = vunpack.c.l.b16 %v649
    %v720 = vunpack.c.h.b16 %v649
    %v721 = vunpack.c.l.b16 %v650
    %v722 = vunpack.c.h.b16 %v650
    %v723 = vunpack.c.l.b16 %v651
    %v724 = vunpack.c.h.b16 %v651
    %v725 = vunpack.c.l.b16 %v652
    %v726 = vunpack.c.h.b16 %v652
    %v727 = vunpack.c.l.b16 %v653
    %v728 = vunpack.c.h.b16 %v653
    %v729 = vunpack.c.l.b16 %v654
    %v730 = vunpack.c.h.b16 %v654
    %v731 = vunpack.c.l.b16 %v655
    %v732 = vunpack.c.h.b16 %v655
    %v733 = vunpack.c.l.b16 %v656
    %v734 = vunpack.c.h.b16 %v656
    %v735 = vunpack.c.l.b16 %v657
    %v736 = vunpack.c.h.b16 %v657
    %v737 = vunpack.c.l.b16 %v658
    %v738 = vunpack.c.h.b16 %v658
    %v739 = vunpack.c.l.b16 %v659
    %v740 = vunpack.c.h.b16 %v659
    %v741 = vunpack.c.l.b16 %v660
    %v742 = vunpack.c.h.b16 %v660
    %v743 = vunpack.c.l.b16 %v661
    %v744 = vunpack.c.h.b16 %v661
    %v745 = vunpack.c.l.b16 %v662
    %v746 = vunpack.c.h.b16 %v662
    %v747 = vunpack.c.l.b16 %v663
    %v748 = vunpack.c.h.b16 %v663
    %v749 = vunpack.c.l.b16 %v664
    %v750 = vunpack.c.h.b16 %v664
    %v751 = vunpack.c.l.b16 %v665
    %v752 = vunpack.c.h.b16 %v665
    %v753 = vunpack.c.l.b16 %v666
    %v754 = vunpack.c.h.b16 %v666
    %v755 = vunpack.c.l.b16 %v667
    %v756 = vunpack.c.h.b16 %v667
    %v757 = vunpack.c.l.b16 %v668
    %v758 = vunpack.c.h.b16 %v668
    %v759 = vunpack.c.l.b16 %v669
    %v760 = vunpack.c.h.b16 %v669
    %v761 = vunpack.c.l.b16 %v670
    %v762 = vunpack.c.h.b16 %v670
    %v763 = vunpack.c.l.b16 %v671
    %v764 = vunpack.c.h.b16 %v671
    %v765 = vunpack.c.l.b16 %v672
    %v766 = vunpack.c.h.b16 %v672
    %v767 = vunpack.c.l.b16 %v673
    %v768 = vunpack.c.h.b16 %v673
    %v769 = vunpack.c.l.b16 %v674
    %v770 = vunpack.c.h.b16 %v674
    %v771 = vunpack.c.l.b16 %v675
    %v772 = vunpack.c.h.b16 %v675
    %v773 = vunpack.c.l.b16 %v676
    %v774 = vunpack.c.h.b16 %v676
    %v775 = vunpack.c.l.b16 %v677
    %v776 = vunpack.c.h.b16 %v677
    %v777 = vunpack.c.l.b16 %v678
    %v778 = vunpack.c.h.b16 %v678
    %v779 = vunpack.c.l.b16 %v679
    %v780 = vunpack.c.h.b16 %v679
    %v781 = vunpack.c.l.b16 %v680
    %v782 = vunpack.c.h.b16 %v680
    %v783 = vpack.c.b16 %v721, %v719
    %v784 = vpack.c.b16 %v722, %v720
    %v785 = vpack.c.b16 %v725, %v723
    %v786 = vpack.c.b16 %v726, %v724
    %v787 = vpack.c.b16 %v729, %v727
    %v788 = vpack.c.b16 %v730, %v728
    %v789 = vpack.c.b16 %v733, %v731
    %v790 = vpack.c.b16 %v734, %v732
    %v791 = vpack.c.b16 %v737, %v735
    %v792 = vpack.c.b16 %v738, %v736
    %v793 = vpack.c.b16 %v741, %v739
    %v794 = vpack.c.b16 %v742, %v740
    %v795 = vpack.c.b16 %v745, %v743
    %v796 = vpack.c.b16 %v746, %v744
    %v797 = vpack.c.b16 %v749, %v747
    %v798 = vpack.c.b16 %v750, %v748
    %v799 = vpack.c.b16 %v753, %v751
    %v800 = vpack.c.b16 %v754, %v752
    %v801 = vpack.c.b16 %v757, %v755
    %v802 = vpack.c.b16 %v758, %v756
    %v803 = vpack.c.b16 %v761, %v759
    %v804 = vpack.c.b16 %v762, %v760
    %v805 = vpack.c.b16 %v765, %v763
    %v806 = vpack.c.b16 %v766, %v764
    %v807 = vpack.c.b16 %v769, %v767
    %v808 = vpack.c.b16 %v770, %v768
    %v809 = vpack.c.b16 %v773, %v771
    %v810 = vpack.c.b16 %v774, %v772
    %v811 = vpack.c.b16 %v777, %v775
    %v812 = vpack.c.b16 %v778, %v776
    %v813 = vpack.c.b16 %v781, %v779
    %v814 = vpack.c.b16 %v782, %v780
    %847 = vmatpush.bf16.msra.mxu0 %v797
    %848 = vmatpush.bf16.msra.mxu0 %v795
    %849 = vmatpush.bf16.msra.mxu0 %v793
    %850 = vmatpush.bf16.msra.mxu0 %v791
    %851 = vmatpush.bf16.msra.mxu0 %v789
    %852 = vmatpush.bf16.msra.mxu0 %v787
    %853 = vmatpush.bf16.msra.mxu0 %v785
    %854 = vmatpush.bf16.msra.mxu0 %v783
    %855 = vmatmul.bf16.gmra.mxu0 %v647
    %v856 = vpop.f32.mrf.mxu0
    %v857 = vadd.f32 %v683, %v856
    %v858 = vpop.f32.mrf.mxu0
    %859 = vdwg.mxu0
    %860 = vmatpush.bf16.msra.mxu0 %v813
    %861 = vmatpush.bf16.msra.mxu0 %v811
    %862 = vmatpush.bf16.msra.mxu0 %v809
    %863 = vmatpush.bf16.msra.mxu0 %v807
    %864 = vmatpush.bf16.msra.mxu0 %v805
    %865 = vmatpush.bf16.msra.mxu0 %v803
    %866 = vmatpush.bf16.msra.mxu0 %v801
    %867 = vmatpush.bf16.msra.mxu0 %v799
    %868 = vmatmul.bf16.gmra.mxu0 %v648
    %v869 = vpop.f32.mrf.mxu0
    %v870 = vadd.f32 %v857, %v869
    %v871 = vpop.f32.mrf.mxu0
    %872 = vdwg.mxu0
    %873 = vmatpush.bf16.msra.mxu0 %v798
    %874 = vmatpush.bf16.msra.mxu0 %v796
    %875 = vmatpush.bf16.msra.mxu0 %v794
    %876 = vmatpush.bf16.msra.mxu0 %v792
    %877 = vmatpush.bf16.msra.mxu0 %v790
    %878 = vmatpush.bf16.msra.mxu0 %v788
    %879 = vmatpush.bf16.msra.mxu0 %v786
    %880 = vmatpush.bf16.msra.mxu0 %v784
    %881 = vmatmul.bf16.gmra.mxu0 %v647
    %v882 = vpop.f32.mrf.mxu0
    %v883 = vadd.f32 %v684, %v882
    %v884 = vpop.f32.mrf.mxu0
    %885 = vdwg.mxu0
    %886 = vmatpush.bf16.msra.mxu0 %v814
    %887 = vmatpush.bf16.msra.mxu0 %v812
    %888 = vmatpush.bf16.msra.mxu0 %v810
    %889 = vmatpush.bf16.msra.mxu0 %v808
    %890 = vmatpush.bf16.msra.mxu0 %v806
    %891 = vmatpush.bf16.msra.mxu0 %v804
    %892 = vmatpush.bf16.msra.mxu0 %v802
    %893 = vmatpush.bf16.msra.mxu0 %v800
    %894 = vmatmul.bf16.gmra.mxu0 %v648
    %v895 = vpop.f32.mrf.mxu0
    %v896 = vadd.f32 %v883, %v895
    %v897 = vpop.f32.mrf.mxu0
    %898 = vdwg.mxu0
    %v899 = vmax.f32 %v870, 0.0
    %v900 = vmax.f32 %v896, 0.0
    %v901 = vpack.c.bf16 %v899, %v899
    %v902 = vpack.c.bf16 %v900, %v900
    %v903 = vld [vmem:[%s9] sm:$0xf]
    %v904 = vld [vmem:[%s9 + $0x4] sm:$0xf]
    %v905 = vld [vmem:[%s9 + $0x8] sm:$0xf]
    %v906 = vld [vmem:[%s9 + $0xc] sm:$0xf]
    %v907 = vld [vmem:[%s9 + $0x10] sm:$0xf]
    %v908 = vld [vmem:[%s9 + $0x14] sm:$0xf]
    %v909 = vld [vmem:[%s9 + $0x18] sm:$0xf]
    %v910 = vld [vmem:[%s9 + $0x1c] sm:$0xf]
    %v911 = vld [vmem:[%s9 + $0x20] sm:$0xf]
    %v912 = vld [vmem:[%s9 + $0x24] sm:$0xf]
    %v913 = vld [vmem:[%s9 + $0x28] sm:$0xf]
    %v914 = vld [vmem:[%s9 + $0x2c] sm:$0xf]
    %v915 = vld [vmem:[%s9 + $0x30] sm:$0xf]
    %v916 = vld [vmem:[%s9 + $0x34] sm:$0xf]
    %v917 = vld [vmem:[%s9 + $0x38] sm:$0xf]
    %v918 = vld [vmem:[%s9 + $0x3c] sm:$0xf]
    %v919 = vld [vmem:[%s9 + $0x40] sm:$0xf]
    %v920 = vld [vmem:[%s9 + $0x44] sm:$0xf]
    %v921 = vld [vmem:[%s9 + $0x48] sm:$0xf]
    %v922 = vld [vmem:[%s9 + $0x4c] sm:$0xf]
    %v923 = vld [vmem:[%s9 + $0x50] sm:$0xf]
    %v924 = vld [vmem:[%s9 + $0x54] sm:$0xf]
    %v925 = vld [vmem:[%s9 + $0x58] sm:$0xf]
    %v926 = vld [vmem:[%s9 + $0x5c] sm:$0xf]
    %v927 = vld [vmem:[%s9 + $0x60] sm:$0xf]
    %v928 = vld [vmem:[%s9 + $0x64] sm:$0xf]
    %v929 = vld [vmem:[%s9 + $0x68] sm:$0xf]
    %v930 = vld [vmem:[%s9 + $0x6c] sm:$0xf]
    %v931 = vld [vmem:[%s9 + $0x70] sm:$0xf]
    %v932 = vld [vmem:[%s9 + $0x74] sm:$0xf]
    %v933 = vld [vmem:[%s9 + $0x78] sm:$0xf]
    %v934 = vld [vmem:[%s9 + $0x7c] sm:$0xf]
    %v935 = vld [vmem:[%s10] sm:$0x1]
    %v937 = vperm.slane %v935, 0
    %v971 = vunpack.c.l.b16 %v903
    %v972 = vunpack.c.l.b16 %v904
    %v973 = vunpack.c.l.b16 %v905
    %v974 = vunpack.c.l.b16 %v906
    %v975 = vunpack.c.l.b16 %v907
    %v976 = vunpack.c.l.b16 %v908
    %v977 = vunpack.c.l.b16 %v909
    %v978 = vunpack.c.l.b16 %v910
    %v979 = vunpack.c.l.b16 %v911
    %v980 = vunpack.c.l.b16 %v912
    %v981 = vunpack.c.l.b16 %v913
    %v982 = vunpack.c.l.b16 %v914
    %v983 = vunpack.c.l.b16 %v915
    %v984 = vunpack.c.l.b16 %v916
    %v985 = vunpack.c.l.b16 %v917
    %v986 = vunpack.c.l.b16 %v918
    %v987 = vunpack.c.l.b16 %v919
    %v988 = vunpack.c.l.b16 %v920
    %v989 = vunpack.c.l.b16 %v921
    %v990 = vunpack.c.l.b16 %v922
    %v991 = vunpack.c.l.b16 %v923
    %v992 = vunpack.c.l.b16 %v924
    %v993 = vunpack.c.l.b16 %v925
    %v994 = vunpack.c.l.b16 %v926
    %v995 = vunpack.c.l.b16 %v927
    %v996 = vunpack.c.l.b16 %v928
    %v997 = vunpack.c.l.b16 %v929
    %v998 = vunpack.c.l.b16 %v930
    %v999 = vunpack.c.l.b16 %v931
    %v1000 = vunpack.c.l.b16 %v932
    %v1001 = vunpack.c.l.b16 %v933
    %v1002 = vunpack.c.l.b16 %v934
    %v1003 = vpack.c.b16 %v972, %v971
    %v1004 = vpack.c.b16 %v974, %v973
    %v1005 = vpack.c.b16 %v976, %v975
    %v1006 = vpack.c.b16 %v978, %v977
    %v1007 = vpack.c.b16 %v980, %v979
    %v1008 = vpack.c.b16 %v982, %v981
    %v1009 = vpack.c.b16 %v984, %v983
    %v1010 = vpack.c.b16 %v986, %v985
    %v1011 = vpack.c.b16 %v988, %v987
    %v1012 = vpack.c.b16 %v990, %v989
    %v1013 = vpack.c.b16 %v992, %v991
    %v1014 = vpack.c.b16 %v994, %v993
    %v1015 = vpack.c.b16 %v996, %v995
    %v1016 = vpack.c.b16 %v998, %v997
    %v1017 = vpack.c.b16 %v1000, %v999
    %v1018 = vpack.c.b16 %v1002, %v1001
    %1035 = vmatpush.bf16.msra.mxu0 %v1010
    %1036 = vmatpush.bf16.msra.mxu0 %v1009
    %1037 = vmatpush.bf16.msra.mxu0 %v1008
    %1038 = vmatpush.bf16.msra.mxu0 %v1007
    %1039 = vmatpush.bf16.msra.mxu0 %v1006
    %1040 = vmatpush.bf16.msra.mxu0 %v1005
    %1041 = vmatpush.bf16.msra.mxu0 %v1004
    %1042 = vmatpush.bf16.msra.mxu0 %v1003
    %1043 = vmatmul.bf16.gmra.mxu0 %v901
    %v1044 = vpop.f32.mrf.mxu0
    %v1045 = vadd.f32 %v937, %v1044
    %v1046 = vpop.f32.mrf.mxu0
    %1047 = vdwg.mxu0
    %1048 = vmatpush.bf16.msra.mxu0 %v1018
    %1049 = vmatpush.bf16.msra.mxu0 %v1017
    %1050 = vmatpush.bf16.msra.mxu0 %v1016
    %1051 = vmatpush.bf16.msra.mxu0 %v1015
    %1052 = vmatpush.bf16.msra.mxu0 %v1014
    %1053 = vmatpush.bf16.msra.mxu0 %v1013
    %1054 = vmatpush.bf16.msra.mxu0 %v1012
    %1055 = vmatpush.bf16.msra.mxu0 %v1011
    %1056 = vmatmul.bf16.gmra.mxu0 %v902
    %v1057 = vpop.f32.mrf.mxu0
    %v1058 = vadd.f32 %v1045, %v1057
    %v1059 = vpop.f32.mrf.mxu0
    %1060 = vdwg.mxu0
    %v1061 = vlaneseq
    %v1062 = vand.u32 %v1061, 127
    %vm1063 = vcmp.ge.s32.totalorder %v1062, 8
    %v1064 = vmax.f32 %v1058, -10.0
    %v1065 = vmin.f32 %v1064, 2.0
    %v1066 = vsel %vm1063, %v1065, %v1058
    %1067 = vst.msk [vmem:[#allocation8] sm:$0xff] %vm107, %v1066
    // Predicated region
    $region58: #{tpu_custom_call.1} parent=1 // pred_check
      _
    $region59: #{tpu_custom_call.1} parent=1 // pred_check_branch
      %1069 = sbr.rel (0) target = $region61
    $region60: #{tpu_custom_call.1} parent=1 // pred_region
      %1071 = vsyncadd [#allocation4], 0
      %s1073 = sshll.u32 [#allocation8], 4
      %s1074 = int_to_ptr.vmem [resolvable:$true] %s1073
      %s1075 = sshll.u32 %s11, 4
      %s1076 = int_to_ptr.hbm [resolvable:$true] %s1075
      %1078 = dma.vmem_to_hbm [thread:$0]  %s1074, 128, %s1076, [#allocation4]
    $region61: #{tpu_custom_call.1} parent=1 // pred_fallthru
      _
    // Predicated region
    $region62: #{tpu_custom_call.1} parent=1 // pred_check
      _
    $region63: #{tpu_custom_call.1} parent=1 // pred_check_branch
      %1080 = sbr.rel (0) target = $region65
    $region64: #{tpu_custom_call.1} parent=1 // pred_region
      %1082 = dma.done [#allocation4], 128
    $region65: #{tpu_custom_call.1} parent=1 // pred_fallthru
      _
    %1083 = vsyncpa [#allocation3], 1
    %1084 = vsyncpa [#allocation6], 1
    %1085 = vsyncpa [#allocation4], 1

</llo_original>
